<compile_context>
chip_gen: v7x
topology: tpu7x:2x2x1
jax: 0.10.0
libtpu: 0.0.40
codegen_flags: <defaults>
</compile_context>

<pallas_src>
import functools

import jax
import jax.numpy as jnp
from jax.experimental import pallas as pl
from jax.experimental.pallas import tpu as pltpu


def residual_stack_kernel(x_ref, w3_ref, w1_ref, o_ref, *, num_layers, post_gain):
    """One (Bt, C, T) batch tile per grid step, NCL layout.

    x_ref : (Bt, C, T)  input tile (time on the 128-lane axis)
    w3_ref: (H, 3*C)    im2col conv3 weight, columns ordered [tap t-1 | tap t | tap t+1]
    w1_ref: (C, H)      conv1x1 weight (torch (C, H, 1) squeezed)
    o_ref : (Bt, C, T)
    """
    w3 = w3_ref[...].astype(jnp.float32)        # (H, 3C)
    w1 = w1_ref[...].astype(jnp.float32)        # (C, H)
    bt, c, t = x_ref.shape

    # Border masks for the zero-padded 3-tap conv (hoisted out of all loops).
    t_idx = jax.lax.broadcasted_iota(jnp.int32, (c, t), dimension=1)
    first_col = t_idx == 0
    last_col = t_idx == t - 1

    for b in range(bt):                          # static, fully unrolled batch loop
        x = x_ref[b].astype(jnp.float32)         # (C, T)
        for _ in range(num_layers):              # static, fully unrolled (shared weights)
            h = jnp.maximum(x, 0.0)              # ReLU
            # Time-shifted copies via XLU lane rolls + border masking (== zero padding).
            h_m1 = jnp.where(first_col, 0.0, pltpu.roll(h, shift=1, axis=1))      # h[:, t-1]
            h_p1 = jnp.where(last_col, 0.0, pltpu.roll(h, shift=t - 1, axis=1))   # h[:, t+1]
            stacked = jnp.concatenate([h_m1, h, h_p1], axis=0)                    # (3C, T)
            # Conv1d(k=3, pad=1, bias=False): one fused im2col matmul, K = 3C.
            y = jnp.dot(w3, stacked, preferred_element_type=jnp.float32)          # (H, T)
            g = jnp.maximum(y, 0.0)                                               # ReLU
            r = jnp.dot(w1, g, preferred_element_type=jnp.float32)                # (C, T)
            # x + Residual(x), Residual(x) = x + post_gain * res_path(x)
            x = 2.0 * x + post_gain * r
        o_ref[b] = jnp.maximum(x, 0.0).astype(o_ref.dtype)   # final stack ReLU


def _pick_batch_block(B, C, T):
    """Batch elements per grid step: amortize the ~0.35us/step fixed overhead,
    but keep grid >= 2 so v7x's two TensorCores both get work; budget ~2 MiB of
    input tile per step (safe for v7x's 64 MiB VMEM with double buffering)."""
    per_batch_bytes = C * T * 4
    bt = max(1, min(B, (2 * 1024 * 1024) // max(per_batch_bytes, 1)))
    if B >= 2:
        bt = min(bt, B // 2)
    while B % bt:
        bt -= 1
    return bt


def residual_stack(x_ncl, w3_torch, w1_torch, *, num_layers, post_gain=1.0):
    """x_ncl: (B, C, T) float32 (PyTorch Conv1d layout). Returns (B, C, T).

    w3_torch: (H, C, 3)  Conv1d(k=3) effective weight (weight_norm folded, bias=False)
    w1_torch: (C, H, 1)  Conv1d(k=1) effective weight (bias=False)
    """
    B, C, T = x_ncl.shape
    H = w3_torch.shape[0]

    # im2col weight: rows = H, cols ordered [tap0(C) | tap1(C) | tap2(C)], where
    # tap k pairs with x[:, t + k - 1] (torch cross-correlation with pad=1).
    w3_flat = jnp.transpose(w3_torch, (0, 2, 1)).reshape(H, 3 * C)
    w1_mat = w1_torch[:, :, 0]                   # (C, H)

    Bt = _pick_batch_block(B, C, T)
    grid = (B // Bt,)

    kernel = functools.partial(residual_stack_kernel,
                               num_layers=num_layers, post_gain=post_gain)

    tile_bytes = Bt * C * T * 4
    weight_bytes = (H * 3 * C + C * H) * 4
    # 2x double-buffered (in + out) tiles + weights + headroom; sized for v7x 64 MiB,
    # and explicitly raised above v5e's 16 MiB default when tiles grow.
    vmem_limit = int(min(max(8 * tile_bytes + 4 * weight_bytes, 16 * 1024 * 1024),
                         48 * 1024 * 1024))

    flops = 2 * num_layers * B * T * (3 * C * H + H * C)
    bytes_accessed = 2 * B * C * T * 4 + weight_bytes

    out = pl.pallas_call(
        kernel,
        out_shape=jax.ShapeDtypeStruct((B, C, T), jnp.float32),
        grid=grid,
        in_specs=[
            pl.BlockSpec((Bt, C, T), lambda b: (b, 0, 0)),    # per-step batch tile (NCL)
            pl.BlockSpec((H, 3 * C), lambda b: (0, 0)),       # shared conv3 (im2col) weight
            pl.BlockSpec((C, H),     lambda b: (0, 0)),       # shared conv1 weight
        ],
        out_specs=pl.BlockSpec((Bt, C, T), lambda b: (b, 0, 0)),
        compiler_params=pltpu.CompilerParams(
            dimension_semantics=("parallel",),
            vmem_limit_bytes=vmem_limit),
        cost_estimate=pl.CostEstimate(flops=flops, transcendentals=0,
                                      bytes_accessed=bytes_accessed),
    )(x_ncl, w3_flat, w1_mat)
    return out


def reference_forward(x_ncl, w3_torch, w1_torch, *, num_layers, post_gain=1.0):
    """Pure-JAX reference of the same forward (NCL layout) for validation."""
    x = x_ncl
    B, C, T = x.shape
    w1 = w1_torch[:, :, 0]
    for _ in range(num_layers):
        h = jnp.maximum(x, 0.0)
        hp = jnp.pad(h, ((0, 0), (0, 0), (1, 1)))
        acc = (jnp.einsum('hc,bct->bht', w3_torch[:, :, 0], hp[:, :, 0:T])
               + jnp.einsum('hc,bct->bht', w3_torch[:, :, 1], hp[:, :, 1:T + 1])
               + jnp.einsum('hc,bct->bht', w3_torch[:, :, 2], hp[:, :, 2:T + 2]))
        g = jnp.maximum(acc, 0.0)
        r = jnp.einsum('ch,bht->bct', w1, g)
        x = 2.0 * x + post_gain * r
    return jnp.maximum(x, 0.0)


if __name__ == "__main__":
    # Small shapes consistent with the module:
    #   in_channels == num_residual_hiddens (n_out) so the residual add is valid;
    #   T is a multiple of 128 so the lane axis is dense.
    B = 2
    in_channels = 8          # C  (= num_residual_hiddens)
    num_hiddens = 32         # H  (n_hid of the 3-tap conv)
    num_residual_layers = 2
    T = 128                  # sequence length (Conv1d spatial dim)

    key = jax.random.PRNGKey(0)
    kx, kw3, kw1 = jax.random.split(key, 3)

    x = jax.random.normal(kx, (B, in_channels, T), dtype=jnp.float32)
    # Deterministic synthetic weights in torch Conv1d layout
    # (effective weight-norm weights; bias=False in the module).
    w3 = 0.1 * jax.random.normal(kw3, (num_hiddens, in_channels, 3), dtype=jnp.float32)
    w1 = 0.1 * jax.random.normal(kw1, (in_channels, num_hiddens, 1), dtype=jnp.float32)

    out = residual_stack(x, w3, w1, num_layers=num_residual_layers)
    out = jax.block_until_ready(out)

    ref = reference_forward(x, w3, w1, num_layers=num_residual_layers)
    assert out.shape == (B, in_channels, T)
    assert jnp.allclose(out, ref, atol=1e-4, rtol=1e-4), "mismatch vs reference"

    print("KERNEL_OK")
</pallas_src>

<mosaic_0001>
module attributes {stable_mosaic.version = 11 : i64} {
  func.func @residual_stack_kernel(%arg0: i32, %arg1: memref<1x8x128xf32, #tpu.memory_space<vmem>>, %arg2: memref<32x24xf32, #tpu.memory_space<vmem>>, %arg3: memref<8x32xf32, #tpu.memory_space<vmem>>, %arg4: memref<1x8x128xf32, #tpu.memory_space<vmem>>) attributes {dimension_semantics = [#tpu.dimension_semantics<parallel>], iteration_bounds = array<i64: 2>, scalar_prefetch = 0 : i64, scratch_operands = 0 : i64, tpu.core_type = #tpu.core_type<tc>, window_params = [{transform_indices = @transform_0, window_bounds = array<i64: 1, 8, 128>}, {pipeline_mode = #tpu.pipeline_mode<synchronous>, transform_indices = @transform_1, window_bounds = array<i64: 32, 24>}, {pipeline_mode = #tpu.pipeline_mode<synchronous>, transform_indices = @transform_2, window_bounds = array<i64: 8, 32>}, {transform_indices = @transform_3, window_bounds = array<i64: 1, 8, 128>}]} {
    %c0 = arith.constant 0 : index
    %c0_0 = arith.constant 0 : index
    %0 = vector.load %arg2[%c0, %c0_0] : memref<32x24xf32, #tpu.memory_space<vmem>>, vector<32x24xf32>
    %c0_1 = arith.constant 0 : index
    %c0_2 = arith.constant 0 : index
    %1 = vector.load %arg3[%c0_1, %c0_2] : memref<8x32xf32, #tpu.memory_space<vmem>>, vector<8x32xf32>
    %2 = tpu.iota {dimensions = array<i32: 1>} : vector<8x128xi32>
    %c0_i32 = arith.constant 0 : i32
    %3 = vector.broadcast %c0_i32 : i32 to vector<8x128xi32>
    %4 = arith.cmpi eq, %2, %3 : vector<8x128xi32>
    %c127_i32 = arith.constant 127 : i32
    %5 = vector.broadcast %c127_i32 : i32 to vector<8x128xi32>
    %6 = arith.cmpi eq, %2, %5 : vector<8x128xi32>
    %c0_3 = arith.constant 0 : index
    %c0_4 = arith.constant 0 : index
    %c0_5 = arith.constant 0 : index
    %7 = vector.load %arg1[%c0_3, %c0_4, %c0_5] : memref<1x8x128xf32, #tpu.memory_space<vmem>>, vector<1x8x128xf32>
    %8 = vector.shape_cast %7 : vector<1x8x128xf32> to vector<8x128xf32>
    %cst = arith.constant 0.000000e+00 : f32
    %9 = vector.broadcast %cst : f32 to vector<8x128xf32>
    %10 = arith.maximumf %8, %9 : vector<8x128xf32>
    %c1_i32 = arith.constant 1 : i32
    %11 = tpu.dynamic_rotate %10 by %c1_i32 dim 1 : vector<8x128xf32>, i32 -> vector<8x128xf32>
    %cst_6 = arith.constant 0.000000e+00 : f32
    %12 = vector.broadcast %cst_6 : f32 to vector<8x128xf32>
    %13 = arith.select %4, %12, %11 : vector<8x128xi1>, vector<8x128xf32>
    %c127_i32_7 = arith.constant 127 : i32
    %14 = tpu.dynamic_rotate %10 by %c127_i32_7 dim 1 : vector<8x128xf32>, i32 -> vector<8x128xf32>
    %cst_8 = arith.constant 0.000000e+00 : f32
    %15 = vector.broadcast %cst_8 : f32 to vector<8x128xf32>
    %16 = arith.select %6, %15, %14 : vector<8x128xi1>, vector<8x128xf32>
    %17 = tpu.concatenate %13, %10, %16 in 0 : vector<8x128xf32>, vector<8x128xf32>, vector<8x128xf32> -> vector<24x128xf32>
    %cst_9 = arith.constant dense<0.000000e+00> : vector<32x128xf32>
    %18 = tpu.matmul %0, %17, %cst_9 {dimension_numbers = #tpu.dot_dimension_numbers<[1], [0], [0], [1], [0, 0, 1, 1], [], []>} : vector<32x24xf32>, vector<24x128xf32>, vector<32x128xf32> -> vector<32x128xf32>
    %cst_10 = arith.constant 0.000000e+00 : f32
    %19 = vector.broadcast %cst_10 : f32 to vector<32x128xf32>
    %20 = arith.maximumf %18, %19 : vector<32x128xf32>
    %cst_11 = arith.constant dense<0.000000e+00> : vector<8x128xf32>
    %21 = tpu.matmul %1, %20, %cst_11 {dimension_numbers = #tpu.dot_dimension_numbers<[1], [0], [0], [1], [0, 0, 1, 1], [], []>} : vector<8x32xf32>, vector<32x128xf32>, vector<8x128xf32> -> vector<8x128xf32>
    %cst_12 = arith.constant 2.000000e+00 : f32
    %22 = vector.broadcast %cst_12 : f32 to vector<8x128xf32>
    %23 = arith.mulf %22, %8 : vector<8x128xf32>
    %cst_13 = arith.constant 1.000000e+00 : f32
    %24 = vector.broadcast %cst_13 : f32 to vector<8x128xf32>
    %25 = arith.mulf %24, %21 : vector<8x128xf32>
    %26 = arith.addf %23, %25 : vector<8x128xf32>
    %cst_14 = arith.constant 0.000000e+00 : f32
    %27 = vector.broadcast %cst_14 : f32 to vector<8x128xf32>
    %28 = arith.maximumf %26, %27 : vector<8x128xf32>
    %c1_i32_15 = arith.constant 1 : i32
    %29 = tpu.dynamic_rotate %28 by %c1_i32_15 dim 1 : vector<8x128xf32>, i32 -> vector<8x128xf32>
    %cst_16 = arith.constant 0.000000e+00 : f32
    %30 = vector.broadcast %cst_16 : f32 to vector<8x128xf32>
    %31 = arith.select %4, %30, %29 : vector<8x128xi1>, vector<8x128xf32>
    %c127_i32_17 = arith.constant 127 : i32
    %32 = tpu.dynamic_rotate %28 by %c127_i32_17 dim 1 : vector<8x128xf32>, i32 -> vector<8x128xf32>
    %cst_18 = arith.constant 0.000000e+00 : f32
    %33 = vector.broadcast %cst_18 : f32 to vector<8x128xf32>
    %34 = arith.select %6, %33, %32 : vector<8x128xi1>, vector<8x128xf32>
    %35 = tpu.concatenate %31, %28, %34 in 0 : vector<8x128xf32>, vector<8x128xf32>, vector<8x128xf32> -> vector<24x128xf32>
    %cst_19 = arith.constant dense<0.000000e+00> : vector<32x128xf32>
    %36 = tpu.matmul %0, %35, %cst_19 {dimension_numbers = #tpu.dot_dimension_numbers<[1], [0], [0], [1], [0, 0, 1, 1], [], []>} : vector<32x24xf32>, vector<24x128xf32>, vector<32x128xf32> -> vector<32x128xf32>
    %cst_20 = arith.constant 0.000000e+00 : f32
    %37 = vector.broadcast %cst_20 : f32 to vector<32x128xf32>
    %38 = arith.maximumf %36, %37 : vector<32x128xf32>
    %cst_21 = arith.constant dense<0.000000e+00> : vector<8x128xf32>
    %39 = tpu.matmul %1, %38, %cst_21 {dimension_numbers = #tpu.dot_dimension_numbers<[1], [0], [0], [1], [0, 0, 1, 1], [], []>} : vector<8x32xf32>, vector<32x128xf32>, vector<8x128xf32> -> vector<8x128xf32>
    %cst_22 = arith.constant 2.000000e+00 : f32
    %40 = vector.broadcast %cst_22 : f32 to vector<8x128xf32>
    %41 = arith.mulf %40, %26 : vector<8x128xf32>
    %cst_23 = arith.constant 1.000000e+00 : f32
    %42 = vector.broadcast %cst_23 : f32 to vector<8x128xf32>
    %43 = arith.mulf %42, %39 : vector<8x128xf32>
    %44 = arith.addf %41, %43 : vector<8x128xf32>
    %cst_24 = arith.constant 0.000000e+00 : f32
    %45 = vector.broadcast %cst_24 : f32 to vector<8x128xf32>
    %46 = arith.maximumf %44, %45 : vector<8x128xf32>
    %c0_25 = arith.constant 0 : index
    %c0_26 = arith.constant 0 : index
    %c0_27 = arith.constant 0 : index
    %47 = vector.load %arg4[%c0_25, %c0_26, %c0_27] : memref<1x8x128xf32, #tpu.memory_space<vmem>>, vector<1x8x128xf32>
    %48 = vector.shape_cast %47 : vector<1x8x128xf32> to vector<8x128xf32>
    %49 = vector.shape_cast %46 : vector<8x128xf32> to vector<1x8x128xf32>
    tpu.vector_store %arg4[%c0_25, %c0_26, %c0_27], %49 {strides = array<i32>} : memref<1x8x128xf32, #tpu.memory_space<vmem>>, vector<1x8x128xf32>,
    return
  }
  func.func @transform_0(%arg0: i32) -> (i32, i32, i32) {
    %c0_i32 = arith.constant 0 : i32
    %c0_i32_0 = arith.constant 0 : i32
    %c0_i32_1 = arith.constant 0 : i32
    return %arg0, %c0_i32, %c0_i32_0 : i32, i32, i32
  }
  func.func @transform_1(%arg0: i32) -> (i32, i32) {
    %c0_i32 = arith.constant 0 : i32
    %c0_i32_0 = arith.constant 0 : i32
    %c0_i32_1 = arith.constant 0 : i32
    return %c0_i32, %c0_i32_0 : i32, i32
  }
  func.func @transform_2(%arg0: i32) -> (i32, i32) {
    %c0_i32 = arith.constant 0 : i32
    %c0_i32_0 = arith.constant 0 : i32
    %c0_i32_1 = arith.constant 0 : i32
    return %c0_i32, %c0_i32_0 : i32, i32
  }
  func.func @transform_3(%arg0: i32) -> (i32, i32, i32) {
    %c0_i32 = arith.constant 0 : i32
    %c0_i32_0 = arith.constant 0 : i32
    %c0_i32_1 = arith.constant 0 : i32
    return %arg0, %c0_i32, %c0_i32_0 : i32, i32, i32
  }
}

</mosaic_0001>

<llo_original>
// kernel: tpu_custom_call.1
$region0: #{tpu_custom_call.1}
  #allocation0 [shape = 'u32[]', space=smem, size = 0x4, offset = 0x4, fixed_abs, tag = 'smem constant byte address 0x4 - core index']
  #allocation1 [shape = 'u32[144,128]{1,0:T(1,128)}', space=vmem, size = 0x12000, scoped, tag = 'internal scratch']
  %s0 = inlined_call_operand.vmem [shape: f32[2,8,128], index: 0, kind: input, shape index: {}]
  %s1 = inlined_call_operand.vmem [shape: f32[32,24], index: 1, kind: input, shape index: {}]
  %s2 = inlined_call_operand.vmem [shape: f32[8,32], index: 2, kind: input, shape index: {}]
  %s3 = inlined_call_operand.hbm [shape: f32[2,8,128], index: 3, kind: output, shape index: {}]
  %s4 = sld [smem:[#allocation0]]
  $region45: #{tpu_custom_call.1} parent=0
    _
  %s6 = ssub.s32 1, %s4
  %s7 = scalar_select 0, %s6, %s4
  $region1: #{tpu_custom_call.1} parent=0
    #allocation2 [shape = 'u8[8192]{0}', space=vmem, size = 0x2000, scoped, tag = 'output window, operand 0']
    #allocation3 [shape = 's32[2]{0}', space=sflag, size = 0x8, scoped, tag = 'scoped memory for tpu_custom_call.1']
    %8 = vsyncpa [#allocation3], 0
    %s9 = scalar_lea.sflag [#allocation3], 1
    %10 = vsyncpa %s9, 0
    loop: start=0, step=1, limit=4
    $region2: #{tpu_custom_call.1} parent=1 // loop_pre_header
      _
    $region3: #{tpu_custom_call.1} parent=1 // loop_header
      %s12 = sphi 0, %s16
      %p13 = scmp.ge.s32.totalorder %s12, 4
      %s22 = sphi 0, %s24
      %s25 = sphi 0, %s22
      %s26 = sphi 0, %s25
      %s42 = sphi 0, %s26
      %s46 = sphi 0, %s46
      %s48 = sphi 0, %s46
      %s49 = sphi 0, %s48
      %s63 = sphi 0, %s49
      %s67 = sphi 0, %s67
      %s69 = sphi 0, %s67
      %s70 = sphi 0, %s69
      %s84 = sphi 0, %s70
      %s90 = sphi 0, %s92
      %s93 = sphi 0, %s90
      %s94 = sphi 0, %s93
      %s110 = sphi 0, %s94
    $region4: #{tpu_custom_call.1} parent=1 // loop_header_branch
      %15 = sbr.rel (%p13) target = $region8
    $region5: #{tpu_custom_call.1} parent=1 // loop_body
      %s17 = ssub.s32 %s12, 1
      %s18 = ssub.s32 %s12, 2
      %s19 = sadd.s32 %s12, 1
      %s20 = ssub.s32 %s12, %s19
      %p21 = scmp.eq.s32.totalorder %s20, 0
      %s23 = sadd.s32 %s22, 1
      %s24 = scalar_select %p21, %s22, %s23
      %p27 = pneg %p21
      %p28 = scmp.eq.s32.totalorder %s12, 1
      %p29 = por %p27, %p28
      %p30 = scmp.ne.s32.totalorder %s22, %s25
      %p31 = scmp.eq.s32.totalorder %s12, 0
      %p32 = por %p30, %p31
      %p33 = scmp.ne.s32.totalorder %s22, %s25
      %p34 = scmp.eq.s32.totalorder %s17, 1
      %p35 = por %p33, %p34
      %p36 = scmp.ne.s32.totalorder %s25, %s26
      %p37 = scmp.eq.s32.totalorder %s17, 0
      %p38 = por %p36, %p37
      %p39 = scmp.ne.s32.totalorder %s25, %s26
      %p40 = scmp.eq.s32.totalorder %s18, 1
      %p41 = por %p39, %p40
      %p43 = scmp.ne.s32.totalorder %s26, %s42
      %p44 = scmp.eq.s32.totalorder %s18, 0
      %p45 = por %p43, %p44
      %s47 = sadd.s32 %s46, 1
      %p50 = scmp.eq.s32.totalorder %s12, 1
      %p51 = scmp.ne.s32.totalorder %s46, %s48
      %p52 = scmp.eq.s32.totalorder %s12, 0
      %p53 = por %p51, %p52
      %p54 = scmp.ne.s32.totalorder %s46, %s48
      %p55 = scmp.eq.s32.totalorder %s17, 1
      %p56 = por %p54, %p55
      %p57 = scmp.ne.s32.totalorder %s48, %s49
      %p58 = scmp.eq.s32.totalorder %s17, 0
      %p59 = por %p57, %p58
      %p60 = scmp.ne.s32.totalorder %s48, %s49
      %p61 = scmp.eq.s32.totalorder %s18, 1
      %p62 = por %p60, %p61
      %p64 = scmp.ne.s32.totalorder %s49, %s63
      %p65 = scmp.eq.s32.totalorder %s18, 0
      %p66 = por %p64, %p65
      %s68 = sadd.s32 %s67, 1
      %p71 = scmp.eq.s32.totalorder %s12, 1
      %p72 = scmp.ne.s32.totalorder %s67, %s69
      %p73 = scmp.eq.s32.totalorder %s12, 0
      %p74 = por %p72, %p73
      %p75 = scmp.ne.s32.totalorder %s67, %s69
      %p76 = scmp.eq.s32.totalorder %s17, 1
      %p77 = por %p75, %p76
      %p78 = scmp.ne.s32.totalorder %s69, %s70
      %p79 = scmp.eq.s32.totalorder %s17, 0
      %p80 = por %p78, %p79
      %p81 = scmp.ne.s32.totalorder %s69, %s70
      %p82 = scmp.eq.s32.totalorder %s18, 1
      %p83 = por %p81, %p82
      %p85 = scmp.ne.s32.totalorder %s70, %s84
      %p86 = scmp.eq.s32.totalorder %s18, 0
      %p87 = por %p85, %p86
      %s88 = ssub.s32 %s12, %s19
      %p89 = scmp.eq.s32.totalorder %s88, 0
      %s91 = sadd.s32 %s90, 1
      %s92 = scalar_select %p89, %s90, %s91
      %p95 = pneg %p89
      %p96 = scmp.eq.s32.totalorder %s12, 1
      %p97 = por %p95, %p96
      %p98 = scmp.ne.s32.totalorder %s90, %s93
      %p99 = scmp.eq.s32.totalorder %s12, 0
      %p100 = por %p98, %p99
      %p101 = scmp.ne.s32.totalorder %s90, %s93
      %p102 = scmp.eq.s32.totalorder %s17, 1
      %p103 = por %p101, %p102
      %p104 = scmp.ne.s32.totalorder %s93, %s94
      %p105 = scmp.eq.s32.totalorder %s17, 0
      %p106 = por %p104, %p105
      %p107 = scmp.ne.s32.totalorder %s93, %s94
      %p108 = scmp.eq.s32.totalorder %s18, 1
      %p109 = por %p107, %p108
      %p111 = scmp.ne.s32.totalorder %s94, %s110
      %p112 = scmp.eq.s32.totalorder %s18, 0
      %p113 = por %p111, %p112
      %p114 = scmp.le.s32.totalorder 1, %s12
      %p115 = scmp.lt.s32.totalorder %s12, 3
      %p116 = pnand %p114, %p115
      %p117 = pneg %p116
      // Predicated region
      $region9: #{tpu_custom_call.1} parent=5 // pred_check
        _
      $region10: #{tpu_custom_call.1} parent=5 // pred_check_branch
        %119 = sbr.rel (%p116) target = $region12
      $region11: #{tpu_custom_call.1} parent=5 // pred_region
        %s120 = ssub.s32 %s12, 1
        // Predicated region
        $region13: #{tpu_custom_call.1} parent=11 // pred_check
          %p121 = pneg %p59
        $region14: #{tpu_custom_call.1} parent=11 // pred_check_branch
          %123 = sbr.rel (%p121) target = $region16
        $region15: #{tpu_custom_call.1} parent=11 // pred_region
          _
        $region16: #{tpu_custom_call.1} parent=11 // pred_fallthru
          _
        // Predicated region
        $region17: #{tpu_custom_call.1} parent=11 // pred_check
          %p124 = pneg %p80
        $region18: #{tpu_custom_call.1} parent=11 // pred_check_branch
          %126 = sbr.rel (%p124) target = $region20
        $region19: #{tpu_custom_call.1} parent=11 // pred_region
          _
        $region20: #{tpu_custom_call.1} parent=11 // pred_fallthru
          _
      $region12: #{tpu_custom_call.1} parent=5 // pred_fallthru
        _
      %p127 = scmp.lt.s32.totalorder %s12, 2
      // Predicated region
      $region21: #{tpu_custom_call.1} parent=5 // pred_check
        %p128 = pneg %p127
      $region22: #{tpu_custom_call.1} parent=5 // pred_check_branch
        %130 = sbr.rel (%p128) target = $region24
      $region23: #{tpu_custom_call.1} parent=5 // pred_region
        // Predicated region
        $region25: #{tpu_custom_call.1} parent=23 // pred_check
          %p131 = pneg %p32
        $region26: #{tpu_custom_call.1} parent=23 // pred_check_branch
          %133 = sbr.rel (%p131) target = $region28
        $region27: #{tpu_custom_call.1} parent=23 // pred_region
          %p134 = scmp.lt.s32.totalorder %s12, 1
          %s135 = scalar_select %p134, %s12, 1
          %s136 = smul.addr %s135, 8
          %s137 = scalar_lea.vmem %s0, %s136
        $region28: #{tpu_custom_call.1} parent=23 // pred_fallthru
          _
      $region24: #{tpu_custom_call.1} parent=5 // pred_fallthru
        _
      %p138 = scmp.le.s32.totalorder 1, %s12
      %p139 = scmp.lt.s32.totalorder %s12, 3
      %p140 = pnand %p138, %p139
      %p141 = pneg %p140
      // Predicated region
      $region29: #{tpu_custom_call.1} parent=5 // pred_check
        _
      $region30: #{tpu_custom_call.1} parent=5 // pred_check_branch
        %143 = sbr.rel (%p140) target = $region32
      $region31: #{tpu_custom_call.1} parent=5 // pred_region
        %s144 = ssub.s32 %s12, 1
        %p145 = scmp.lt.s32.totalorder %s17, 1
        %s146 = scalar_select %p145, %s17, 1
        %s147 = smul.addr %s146, 8
        %s148 = scalar_lea.vmem %s0, %s147
        %p149 = pneg %p38
        %p150 = pneg %p35
        %p151 = pneg %p59
        %p152 = pneg %p56
        %p153 = pneg %p80
        %p154 = pneg %p77
        %p155 = pneg %p106
        %p156 = pneg %p103
        %s157 = sand.u32 %s93, 1
        %s158 = scalar_lea.sflag [#allocation3], %s157
        %s159 = sand.u32 %s93, 1
        %s160 = smul.addr %s159, 8
        %s161 = scalar_lea.vmem [#allocation2], %s160
        %p162 = scmp.lt.s32.totalorder %s17, 1
        %s163 = scalar_select %p162, %s17, 1
        %s164 = smul.addr %s163, 8
        %s165 = scalar_lea.vmem %s0, %s164
        %v166 = vld [vmem:[%s1] sm:$0xff]
        %v167 = vld [vmem:[%s1 + $0x8] sm:$0xff]
        %v168 = vld [vmem:[%s1 + $0x10] sm:$0xff]
        %v169 = vld [vmem:[%s1 + $0x18] sm:$0xff]
        %v170 = vld [vmem:[%s2] sm:$0xff]
        %v171 = vlaneseq
        %v172 = vand.u32 %v171, 127
        %vm173 = vcmp.eq.s32.totalorder %v172, 0
        %vm174 = vcmp.eq.s32.totalorder %v172, 127
        %v175 = vld [vmem:[%s165] sm:$0xff]
        %v176 = vmax.f32 %v175, 0.0
        %177 = vrot.lane.b32.xlu0 %v176, 1
        %v178 = vpop.permute.xlu0 %177
        %v179 = vsel %vm173, 0.0, %v178
        %180 = vrot.lane.b32.xlu0 %v176, 127
        %v181 = vpop.permute.xlu0 %180
        %v182 = vsel %vm174, 0.0, %v181
        %vm183 = vcmask 195584
        %v185 = vsel %vm183, %v166, 0
        %v188 = vsel %vm183, %v167, 0
        %v191 = vsel %vm183, %v168, 0
        %v194 = vsel %vm183, %v169, 0
        %196 = vmatprep.subr.mxu0 0.0
        %197 = vmatpush1.msra.mxu0 %v179
        %198 = vmatprep.subr.mxu0 0.0
        %199 = vmatpush1.msra.mxu0 %v176
        %200 = vmatprep.subr.mxu0 0.0
        %201 = vmatpush1.msra.mxu0 %v182
        %202 = vmatprep.subr.mxu0 0.0
        %203 = vmatpush1.msra.mxu0 0.0
        %204 = vmatprep.subr.mxu0 0.0
        %205 = vmatpush1.msra.mxu0 0.0
        %206 = vmatprep.subr.mxu0 0.0
        %207 = vmatpush1.msra.mxu0 0.0
        %208 = vmatprep.subr.mxu0 0.0
        %209 = vmatpush1.msra.mxu0 0.0
        %210 = vmatprep.subr.mxu0 0.0
        %211 = vmatpush1.msra.mxu0 0.0
        %212 = vmatprep.subr.mxu0 0.0
        %213 = vmatpush1.msra.mxu0 0.0
        %214 = vmatprep.subr.mxu0 0.0
        %215 = vmatpush1.msra.mxu0 0.0
        %216 = vmatprep.subr.mxu0 0.0
        %217 = vmatpush1.msra.mxu0 0.0
        %218 = vmatprep.subr.mxu0 0.0
        %219 = vmatpush1.msra.mxu0 0.0
        %220 = vmatprep.subr.mxu0 0.0
        %221 = vmatpush1.msra.mxu0 0.0
        %222 = vmatprep.subr.mxu0 0.0
        %223 = vmatpush1.msra.mxu0 0.0
        %224 = vmatprep.subr.mxu0 0.0
        %225 = vmatpush1.msra.mxu0 0.0
        %226 = vmatprep.subr.mxu0 0.0
        %227 = vmatpush1.msra.mxu0 0.0
        %228 = vmatprep.subr.mxu0 0.0
        %229 = vmatpush1.msra.mxu0 0.0
        %230 = vmatprep.subr.mxu0 0.0
        %231 = vmatpush1.msra.mxu0 0.0
        %232 = vmatprep.subr.mxu0 0.0
        %233 = vmatpush1.msra.mxu0 0.0
        %234 = vmatprep.subr.mxu0 0.0
        %235 = vmatpush1.msra.mxu0 0.0
        %236 = vmatprep.subr.mxu0 0.0
        %237 = vmatpush1.msra.mxu0 0.0
        %238 = vmatprep.subr.mxu0 0.0
        %239 = vmatpush1.msra.mxu0 0.0
        %240 = vmatprep.subr.mxu0 0.0
        %241 = vmatpush1.msra.mxu0 0.0
        %242 = vmatprep.subr.mxu0 0.0
        %243 = vmatpush1.msra.mxu0 0.0
        %244 = vmatprep.subr.mxu0 0.0
        %245 = vmatpush1.msra.mxu0 0.0
        %246 = vmatprep.subr.mxu0 0.0
        %247 = vmatpush1.msra.mxu0 0.0
        %248 = vmatprep.subr.mxu0 0.0
        %249 = vmatpush1.msra.mxu0 0.0
        %250 = vmatprep.subr.mxu0 0.0
        %251 = vmatpush1.msra.mxu0 0.0
        %252 = vmatprep.subr.mxu0 0.0
        %253 = vmatpush1.msra.mxu0 0.0
        %254 = vmatprep.subr.mxu0 0.0
        %255 = vmatpush1.msra.mxu0 0.0
        %256 = vmatprep.subr.mxu0 0.0
        %257 = vmatpush1.msra.mxu0 0.0
        %258 = vmatprep.subr.mxu0 0.0
        %259 = vmatpush1.msra.mxu0 0.0
        %260 = vmatprep.mubr.f32.mxu0 0.0
        %261 = vmatmul.mubr.f32.gmra.mrb[0].mxu0 %v185
        %v262 = vpop.f32.mrb[0].mxu0
        %v263 = vadd.f32 0.0, %v262
        %v264 = vpop.f32.mrb[0].mxu0
        %265 = vmatprep.mubr.f32.mxu0 0.0
        %266 = vmatmul.mubr.f32.gmra.mrb[0].mxu0 %v188
        %v267 = vpop.f32.mrb[0].mxu0
        %v268 = vadd.f32 0.0, %v267
        %v269 = vpop.f32.mrb[0].mxu0
        %270 = vmatprep.mubr.f32.mxu0 0.0
        %271 = vmatmul.mubr.f32.gmra.mrb[0].mxu0 %v191
        %v272 = vpop.f32.mrb[0].mxu0
        %v273 = vadd.f32 0.0, %v272
        %v274 = vpop.f32.mrb[0].mxu0
        %275 = vmatprep.mubr.f32.mxu0 0.0
        %276 = vmatmul.mubr.f32.gmra.mrb[0].mxu0 %v194
        %v277 = vpop.f32.mrb[0].mxu0
        %v278 = vadd.f32 0.0, %v277
        %v279 = vpop.f32.mrb[0].mxu0
        %280 = vdwg.mxu0
        %v281 = vmax.f32 %v263, 0.0
        %v282 = vmax.f32 %v268, 0.0
        %v283 = vmax.f32 %v273, 0.0
        %v284 = vmax.f32 %v278, 0.0
        %vm285 = vcmask 261120
        %v287 = vsel %vm285, %v170, 0
        %289 = vmatprep.subr.mxu0 0.0
        %290 = vmatpush1.msra.mxu0 %v281
        %291 = vmatprep.subr.mxu0 0.0
        %292 = vmatpush1.msra.mxu0 %v282
        %293 = vmatprep.subr.mxu0 0.0
        %294 = vmatpush1.msra.mxu0 %v283
        %295 = vmatprep.subr.mxu0 0.0
        %296 = vmatpush1.msra.mxu0 %v284
        %297 = vmatprep.subr.mxu0 0.0
        %298 = vmatpush1.msra.mxu0 0.0
        %299 = vmatprep.subr.mxu0 0.0
        %300 = vmatpush1.msra.mxu0 0.0
        %301 = vmatprep.subr.mxu0 0.0
        %302 = vmatpush1.msra.mxu0 0.0
        %303 = vmatprep.subr.mxu0 0.0
        %304 = vmatpush1.msra.mxu0 0.0
        %305 = vmatprep.subr.mxu0 0.0
        %306 = vmatpush1.msra.mxu0 0.0
        %307 = vmatprep.subr.mxu0 0.0
        %308 = vmatpush1.msra.mxu0 0.0
        %309 = vmatprep.subr.mxu0 0.0
        %310 = vmatpush1.msra.mxu0 0.0
        %311 = vmatprep.subr.mxu0 0.0
        %312 = vmatpush1.msra.mxu0 0.0
        %313 = vmatprep.subr.mxu0 0.0
        %314 = vmatpush1.msra.mxu0 0.0
        %315 = vmatprep.subr.mxu0 0.0
        %316 = vmatpush1.msra.mxu0 0.0
        %317 = vmatprep.subr.mxu0 0.0
        %318 = vmatpush1.msra.mxu0 0.0
        %319 = vmatprep.subr.mxu0 0.0
        %320 = vmatpush1.msra.mxu0 0.0
        %321 = vmatprep.subr.mxu0 0.0
        %322 = vmatpush1.msra.mxu0 0.0
        %323 = vmatprep.subr.mxu0 0.0
        %324 = vmatpush1.msra.mxu0 0.0
        %325 = vmatprep.subr.mxu0 0.0
        %326 = vmatpush1.msra.mxu0 0.0
        %327 = vmatprep.subr.mxu0 0.0
        %328 = vmatpush1.msra.mxu0 0.0
        %329 = vmatprep.subr.mxu0 0.0
        %330 = vmatpush1.msra.mxu0 0.0
        %331 = vmatprep.subr.mxu0 0.0
        %332 = vmatpush1.msra.mxu0 0.0
        %333 = vmatprep.subr.mxu0 0.0
        %334 = vmatpush1.msra.mxu0 0.0
        %335 = vmatprep.subr.mxu0 0.0
        %336 = vmatpush1.msra.mxu0 0.0
        %337 = vmatprep.subr.mxu0 0.0
        %338 = vmatpush1.msra.mxu0 0.0
        %339 = vmatprep.subr.mxu0 0.0
        %340 = vmatpush1.msra.mxu0 0.0
        %341 = vmatprep.subr.mxu0 0.0
        %342 = vmatpush1.msra.mxu0 0.0
        %343 = vmatprep.subr.mxu0 0.0
        %344 = vmatpush1.msra.mxu0 0.0
        %345 = vmatprep.subr.mxu0 0.0
        %346 = vmatpush1.msra.mxu0 0.0
        %347 = vmatprep.subr.mxu0 0.0
        %348 = vmatpush1.msra.mxu0 0.0
        %349 = vmatprep.subr.mxu0 0.0
        %350 = vmatpush1.msra.mxu0 0.0
        %351 = vmatprep.subr.mxu0 0.0
        %352 = vmatpush1.msra.mxu0 0.0
        %353 = vmatprep.mubr.f32.mxu0 0.0
        %354 = vmatmul.mubr.f32.gmra.mrb[0].mxu0 %v287
        %v355 = vpop.f32.mrb[0].mxu0
        %v356 = vadd.f32 0.0, %v355
        %v357 = vpop.f32.mrb[0].mxu0
        %358 = vdwg.mxu0
        %v359 = vmul.f32 %v175, 2.0
        %v360 = vadd.f32 %v359, %v356
        %v361 = vmax.f32 %v360, 0.0
        %362 = vrot.lane.b32.xlu0 %v361, 1
        %v363 = vpop.permute.xlu0 %362
        %v364 = vsel %vm173, 0.0, %v363
        %365 = vrot.lane.b32.xlu0 %v361, 127
        %v366 = vpop.permute.xlu0 %365
        %v367 = vsel %vm174, 0.0, %v366
        %368 = vmatprep.subr.mxu0 0.0
        %369 = vmatpush1.msra.mxu0 %v364
        %370 = vmatprep.subr.mxu0 0.0
        %371 = vmatpush1.msra.mxu0 %v361
        %372 = vmatprep.subr.mxu0 0.0
        %373 = vmatpush1.msra.mxu0 %v367
        %374 = vmatprep.subr.mxu0 0.0
        %375 = vmatpush1.msra.mxu0 0.0
        %376 = vmatprep.subr.mxu0 0.0
        %377 = vmatpush1.msra.mxu0 0.0
        %378 = vmatprep.subr.mxu0 0.0
        %379 = vmatpush1.msra.mxu0 0.0
        %380 = vmatprep.subr.mxu0 0.0
        %381 = vmatpush1.msra.mxu0 0.0
        %382 = vmatprep.subr.mxu0 0.0
        %383 = vmatpush1.msra.mxu0 0.0
        %384 = vmatprep.subr.mxu0 0.0
        %385 = vmatpush1.msra.mxu0 0.0
        %386 = vmatprep.subr.mxu0 0.0
        %387 = vmatpush1.msra.mxu0 0.0
        %388 = vmatprep.subr.mxu0 0.0
        %389 = vmatpush1.msra.mxu0 0.0
        %390 = vmatprep.subr.mxu0 0.0
        %391 = vmatpush1.msra.mxu0 0.0
        %392 = vmatprep.subr.mxu0 0.0
        %393 = vmatpush1.msra.mxu0 0.0
        %394 = vmatprep.subr.mxu0 0.0
        %395 = vmatpush1.msra.mxu0 0.0
        %396 = vmatprep.subr.mxu0 0.0
        %397 = vmatpush1.msra.mxu0 0.0
        %398 = vmatprep.subr.mxu0 0.0
        %399 = vmatpush1.msra.mxu0 0.0
        %400 = vmatprep.subr.mxu0 0.0
        %401 = vmatpush1.msra.mxu0 0.0
        %402 = vmatprep.subr.mxu0 0.0
        %403 = vmatpush1.msra.mxu0 0.0
        %404 = vmatprep.subr.mxu0 0.0
        %405 = vmatpush1.msra.mxu0 0.0
        %406 = vmatprep.subr.mxu0 0.0
        %407 = vmatpush1.msra.mxu0 0.0
        %408 = vmatprep.subr.mxu0 0.0
        %409 = vmatpush1.msra.mxu0 0.0
        %410 = vmatprep.subr.mxu0 0.0
        %411 = vmatpush1.msra.mxu0 0.0
        %412 = vmatprep.subr.mxu0 0.0
        %413 = vmatpush1.msra.mxu0 0.0
        %414 = vmatprep.subr.mxu0 0.0
        %415 = vmatpush1.msra.mxu0 0.0
        %416 = vmatprep.subr.mxu0 0.0
        %417 = vmatpush1.msra.mxu0 0.0
        %418 = vmatprep.subr.mxu0 0.0
        %419 = vmatpush1.msra.mxu0 0.0
        %420 = vmatprep.subr.mxu0 0.0
        %421 = vmatpush1.msra.mxu0 0.0
        %422 = vmatprep.subr.mxu0 0.0
        %423 = vmatpush1.msra.mxu0 0.0
        %424 = vmatprep.subr.mxu0 0.0
        %425 = vmatpush1.msra.mxu0 0.0
        %426 = vmatprep.subr.mxu0 0.0
        %427 = vmatpush1.msra.mxu0 0.0
        %428 = vmatprep.subr.mxu0 0.0
        %429 = vmatpush1.msra.mxu0 0.0
        %430 = vmatprep.subr.mxu0 0.0
        %431 = vmatpush1.msra.mxu0 0.0
        %432 = vmatprep.mubr.f32.mxu0 0.0
        %433 = vmatmul.mubr.f32.gmra.mrb[0].mxu0 %v185
        %v434 = vpop.f32.mrb[0].mxu0
        %v435 = vadd.f32 0.0, %v434
        %v436 = vpop.f32.mrb[0].mxu0
        %437 = vmatprep.mubr.f32.mxu0 0.0
        %438 = vmatmul.mubr.f32.gmra.mrb[0].mxu0 %v188
        %v439 = vpop.f32.mrb[0].mxu0
        %v440 = vadd.f32 0.0, %v439
        %v441 = vpop.f32.mrb[0].mxu0
        %442 = vmatprep.mubr.f32.mxu0 0.0
        %443 = vmatmul.mubr.f32.gmra.mrb[0].mxu0 %v191
        %v444 = vpop.f32.mrb[0].mxu0
        %v445 = vadd.f32 0.0, %v444
        %v446 = vpop.f32.mrb[0].mxu0
        %447 = vmatprep.mubr.f32.mxu0 0.0
        %448 = vmatmul.mubr.f32.gmra.mrb[0].mxu0 %v194
        %v449 = vpop.f32.mrb[0].mxu0
        %v450 = vadd.f32 0.0, %v449
        %v451 = vpop.f32.mrb[0].mxu0
        %452 = vdwg.mxu0
        %v453 = vmax.f32 %v435, 0.0
        %v454 = vmax.f32 %v440, 0.0
        %v455 = vmax.f32 %v445, 0.0
        %v456 = vmax.f32 %v450, 0.0
        %457 = vmatprep.subr.mxu0 0.0
        %458 = vmatpush1.msra.mxu0 %v453
        %459 = vmatprep.subr.mxu0 0.0
        %460 = vmatpush1.msra.mxu0 %v454
        %461 = vmatprep.subr.mxu0 0.0
        %462 = vmatpush1.msra.mxu0 %v455
        %463 = vmatprep.subr.mxu0 0.0
        %464 = vmatpush1.msra.mxu0 %v456
        %465 = vmatprep.subr.mxu0 0.0
        %466 = vmatpush1.msra.mxu0 0.0
        %467 = vmatprep.subr.mxu0 0.0
        %468 = vmatpush1.msra.mxu0 0.0
        %469 = vmatprep.subr.mxu0 0.0
        %470 = vmatpush1.msra.mxu0 0.0
        %471 = vmatprep.subr.mxu0 0.0
        %472 = vmatpush1.msra.mxu0 0.0
        %473 = vmatprep.subr.mxu0 0.0
        %474 = vmatpush1.msra.mxu0 0.0
        %475 = vmatprep.subr.mxu0 0.0
        %476 = vmatpush1.msra.mxu0 0.0
        %477 = vmatprep.subr.mxu0 0.0
        %478 = vmatpush1.msra.mxu0 0.0
        %479 = vmatprep.subr.mxu0 0.0
        %480 = vmatpush1.msra.mxu0 0.0
        %481 = vmatprep.subr.mxu0 0.0
        %482 = vmatpush1.msra.mxu0 0.0
        %483 = vmatprep.subr.mxu0 0.0
        %484 = vmatpush1.msra.mxu0 0.0
        %485 = vmatprep.subr.mxu0 0.0
        %486 = vmatpush1.msra.mxu0 0.0
        %487 = vmatprep.subr.mxu0 0.0
        %488 = vmatpush1.msra.mxu0 0.0
        %489 = vmatprep.subr.mxu0 0.0
        %490 = vmatpush1.msra.mxu0 0.0
        %491 = vmatprep.subr.mxu0 0.0
        %492 = vmatpush1.msra.mxu0 0.0
        %493 = vmatprep.subr.mxu0 0.0
        %494 = vmatpush1.msra.mxu0 0.0
        %495 = vmatprep.subr.mxu0 0.0
        %496 = vmatpush1.msra.mxu0 0.0
        %497 = vmatprep.subr.mxu0 0.0
        %498 = vmatpush1.msra.mxu0 0.0
        %499 = vmatprep.subr.mxu0 0.0
        %500 = vmatpush1.msra.mxu0 0.0
        %501 = vmatprep.subr.mxu0 0.0
        %502 = vmatpush1.msra.mxu0 0.0
        %503 = vmatprep.subr.mxu0 0.0
        %504 = vmatpush1.msra.mxu0 0.0
        %505 = vmatprep.subr.mxu0 0.0
        %506 = vmatpush1.msra.mxu0 0.0
        %507 = vmatprep.subr.mxu0 0.0
        %508 = vmatpush1.msra.mxu0 0.0
        %509 = vmatprep.subr.mxu0 0.0
        %510 = vmatpush1.msra.mxu0 0.0
        %511 = vmatprep.subr.mxu0 0.0
        %512 = vmatpush1.msra.mxu0 0.0
        %513 = vmatprep.subr.mxu0 0.0
        %514 = vmatpush1.msra.mxu0 0.0
        %515 = vmatprep.subr.mxu0 0.0
        %516 = vmatpush1.msra.mxu0 0.0
        %517 = vmatprep.subr.mxu0 0.0
        %518 = vmatpush1.msra.mxu0 0.0
        %519 = vmatprep.subr.mxu0 0.0
        %520 = vmatpush1.msra.mxu0 0.0
        %521 = vmatprep.mubr.f32.mxu0 0.0
        %522 = vmatmul.mubr.f32.gmra.mrb[0].mxu0 %v287
        %v523 = vpop.f32.mrb[0].mxu0
        %v524 = vadd.f32 0.0, %v523
        %v525 = vpop.f32.mrb[0].mxu0
        %526 = vdwg.mxu0
        %v527 = vmul.f32 %v360, 2.0
        %v528 = vadd.f32 %v527, %v524
        %v529 = vmax.f32 %v528, 0.0
        %530 = vst [vmem:[%s161] sm:$0xff] %v529
        %s531 = sand.u32 %s93, 1
        %s532 = scalar_lea.sflag [#allocation3], %s531
        %s533 = sand.u32 %s93, 1
        %s534 = smul.addr %s533, 8
        %s535 = scalar_lea.vmem [#allocation2], %s534
        // Predicated region
        $region33: #{tpu_custom_call.1} parent=31 // pred_check
          %p536 = pneg %p103
        $region34: #{tpu_custom_call.1} parent=31 // pred_check_branch
          %538 = sbr.rel (%p536) target = $region36
        $region35: #{tpu_custom_call.1} parent=31 // pred_region
          %s540 = ssub.s32 128, 128
          %541 = vsyncadd %s532, %s540
          %s542 = smul.addr %s17, 128
          %s543 = scalar_lea.hbm %s3, %s542
          %s545 = sshll.u32 %s535, 4
          %s546 = int_to_ptr.vmem [resolvable:$true] %s545
          %548 = dma.vmem_to_hbm [thread:$0]  %s546, 128, %s543, %s532
        $region36: #{tpu_custom_call.1} parent=31 // pred_fallthru
          _
      $region32: #{tpu_custom_call.1} parent=5 // pred_fallthru
        _
      %p549 = scmp.le.s32.totalorder 2, %s12
      // Predicated region
      $region37: #{tpu_custom_call.1} parent=5 // pred_check
        %p550 = pneg %p549
      $region38: #{tpu_custom_call.1} parent=5 // pred_check_branch
        %552 = sbr.rel (%p550) target = $region40
      $region39: #{tpu_custom_call.1} parent=5 // pred_region
        %s553 = ssub.s32 %s12, 2
        // Predicated region
        $region41: #{tpu_custom_call.1} parent=39 // pred_check
          %p554 = pneg %p109
        $region42: #{tpu_custom_call.1} parent=39 // pred_check_branch
          %556 = sbr.rel (%p554) target = $region44
        $region43: #{tpu_custom_call.1} parent=39 // pred_region
          %s557 = sand.u32 %s94, 1
          %s558 = scalar_lea.sflag [#allocation3], %s557
          %s559 = sand.u32 %s94, 1
          %s560 = smul.addr %s559, 8
          %s561 = scalar_lea.vmem [#allocation2], %s560
          %562 = dma.done %s558, 128
        $region44: #{tpu_custom_call.1} parent=39 // pred_fallthru
          _
      $region40: #{tpu_custom_call.1} parent=5 // pred_fallthru
        _
    $region6: #{tpu_custom_call.1} parent=1 // loop_footer
      %s16 = sadd.s32 1, %s12
    $region7: #{tpu_custom_call.1} parent=1 // loop_footer_branch
      %11 = sbr.rel target = $region3
    $region8: #{tpu_custom_call.1} parent=1 // loop_exit
      _
    %563 = vsyncpa [#allocation3], 1
    %s564 = scalar_lea.sflag [#allocation3], 1
    %565 = vsyncpa %s564, 1

</llo_original>
